<compile_context>
chip_gen: v7x
topology: tpu7x:2x2x1
jax: 0.10.0
libtpu: 0.0.40
codegen_flags: <defaults>
</compile_context>

<pallas_src>
import jax
import jax.numpy as jnp
from jax import lax
from jax.experimental import pallas as pl
from jax.experimental.pallas import tpu as pltpu

HIDDEN = 1024
EPS = 1e-12


def _layernorm_kernel(x_ref, w_ref, b_ref, o_ref):
    # x_ref: (tile_rows, H) in input dtype; w_ref / b_ref: (1, H) float32.
    x = x_ref[...].astype(jnp.float32)
    inv_h = jnp.float32(1.0 / x.shape[-1])
    # Single fused sweep over the tile: sum and sum-of-squares.
    u = jnp.sum(x, axis=-1, keepdims=True) * inv_h            # E[x]
    ex2 = jnp.sum(x * x, axis=-1, keepdims=True) * inv_h      # E[x^2]
    var = jnp.maximum(ex2 - u * u, 0.0)                       # clamp tiny cancellation
    inv = lax.rsqrt(var + EPS)                                 # per-row rsqrt (EUP, exact)
    y = (x - u) * inv                                          # VPU multiply
    o_ref[...] = (w_ref[...] * y + b_ref[...]).astype(o_ref.dtype)


def bert_layer_norm(x, weight, bias, *, tile_rows=None, block_bytes=4 << 20):
    """x: [B, S, H]; weight, bias: [H]. LayerNorm over axis 2 (BertLayerNorm)."""
    B, S, H = x.shape
    assert H == weight.shape[0] == bias.shape[0]
    rows = B * S
    itemsize = jnp.dtype(x.dtype).itemsize

    # Sublane alignment: 8 rows for 4-byte dtypes, 16 for bf16, 32 for int8/fp8.
    align = max(8, 32 // itemsize)

    if tile_rows is None:
        # ~block_bytes per block => 1024 rows for f32 @ H=1024, 2048 for bf16.
        tile_rows = max(align, (block_bytes // (H * itemsize) // align) * align)

    if rows <= tile_rows:
        # Single block covering the full row extent (block == full dim is
        # always layout-legal, even when rows is not sublane-aligned).
        tile_rows = rows
    else:
        tile_rows = max(align, (tile_rows // align) * align)
        if rows < 2 * tile_rows:
            # Split into two roughly equal blocks: gives a v7x megacore two
            # grid steps to shard and avoids a tiny imbalanced tail block.
            half = pl.cdiv(rows, 2)
            tile_rows = ((half + align - 1) // align) * align

    grid = pl.cdiv(rows, tile_rows)

    x2 = x.reshape(rows, H)
    # Pre-cast affine params to f32 once (hoisted out of the kernel).
    w2 = weight.astype(jnp.float32).reshape(1, H)
    b2 = bias.astype(jnp.float32).reshape(1, H)

    # Double-buffered input + output blocks, plus params and headroom.
    needed = 4 * tile_rows * H * itemsize + 4 * H * 4
    vmem_limit = min(56 << 20, max(32 << 20, needed + (8 << 20)))

    out = pl.pallas_call(
        _layernorm_kernel,
        out_shape=jax.ShapeDtypeStruct((rows, H), x.dtype),
        grid_spec=pltpu.PrefetchScalarGridSpec(
            num_scalar_prefetch=0,
            grid=(grid,),
            in_specs=[
                pl.BlockSpec((tile_rows, H), lambda i: (i, 0)),
                pl.BlockSpec((1, H), lambda i: (0, 0)),   # weight: VMEM-resident
                pl.BlockSpec((1, H), lambda i: (0, 0)),   # bias
            ],
            out_specs=pl.BlockSpec((tile_rows, H), lambda i: (i, 0)),
        ),
        compiler_params=pltpu.CompilerParams(
            dimension_semantics=("parallel",),
            vmem_limit_bytes=int(vmem_limit),
        ),
        cost_estimate=pl.CostEstimate(
            flops=8 * rows * H,
            transcendentals=rows,
            bytes_accessed=2 * rows * H * itemsize + 2 * H * 4,
        ),
    )(x2, w2, b2)

    return out.reshape(B, S, H)


def test_module_forward(inputs, weight, bias):
    """Mirrors TestModule.forward: returns a 1-tuple."""
    out1 = bert_layer_norm(inputs, weight, bias)
    return (out1,)


def _reference(x, weight, bias):
    u = jnp.mean(x, axis=2, keepdims=True)
    s = jnp.mean((x - u) ** 2, axis=2, keepdims=True)
    return weight * ((x - u) / jnp.sqrt(s + EPS)) + bias


if __name__ == "__main__":
    key = jax.random.PRNGKey(0)
    kx, kw, kb = jax.random.split(key, 3)

    # Small shape consistent with the module (hidden size fixed at 1024).
    B, S, H = 2, 8, HIDDEN
    x = jax.random.normal(kx, (B, S, H), dtype=jnp.float32)

    # Module init is ones/zeros; perturb deterministically so the affine part
    # is actually exercised.
    weight = jnp.ones((H,), jnp.float32) + 0.1 * jax.random.normal(kw, (H,), jnp.float32)
    bias = jnp.zeros((H,), jnp.float32) + 0.1 * jax.random.normal(kb, (H,), jnp.float32)

    (out,) = test_module_forward(x, weight, bias)
    out = jax.block_until_ready(out)
    assert out.shape == (B, S, H)
    assert jnp.allclose(out, _reference(x, weight, bias), atol=1e-5, rtol=1e-5), \
        "mismatch vs reference (small)"

    # Non-tile-multiple row count, default tiling (single / balanced blocks).
    B2, S2 = 3, 300  # 900 rows
    x_big = jax.random.normal(kx, (B2, S2, H), dtype=jnp.float32)
    (out_big,) = test_module_forward(x_big, weight, bias)
    out_big = jax.block_until_ready(out_big)
    assert jnp.allclose(out_big, _reference(x_big, weight, bias), atol=1e-5, rtol=1e-5), \
        "mismatch vs reference (900 rows, default tile)"

    # Force the multi-block path with a partial tail block (900 = 7*128 + 4)
    # to validate that dropping the wrapper pad/slice is safe.
    out_tail = bert_layer_norm(x_big, weight, bias, tile_rows=128)
    out_tail = jax.block_until_ready(out_tail)
    assert jnp.allclose(out_tail, _reference(x_big, weight, bias), atol=1e-5, rtol=1e-5), \
        "mismatch vs reference (900 rows, partial tail block)"

    # Balanced two-block path (rows between 1x and 2x the tile).
    out_two = bert_layer_norm(x_big, weight, bias, tile_rows=512)
    out_two = jax.block_until_ready(out_two)
    assert jnp.allclose(out_two, _reference(x_big, weight, bias), atol=1e-5, rtol=1e-5), \
        "mismatch vs reference (900 rows, balanced two blocks)"

    print("KERNEL_OK")
</pallas_src>

<mosaic_0001>
module attributes {stable_mosaic.version = 11 : i64} {
  func.func @_layernorm_kernel(%arg0: i32, %arg1: memref<16x1024xf32, #tpu.memory_space<vmem>>, %arg2: memref<1x1024xf32, #tpu.memory_space<vmem>>, %arg3: memref<1x1024xf32, #tpu.memory_space<vmem>>, %arg4: memref<16x1024xf32, #tpu.memory_space<vmem>>) attributes {dimension_semantics = [#tpu.dimension_semantics<parallel>], iteration_bounds = array<i64: 1>, scalar_prefetch = 0 : i64, scratch_operands = 0 : i64, tpu.core_type = #tpu.core_type<tc>, window_params = [{transform_indices = @transform_0, window_bounds = array<i64: 16, 1024>}, {pipeline_mode = #tpu.pipeline_mode<synchronous>, transform_indices = @transform_1, window_bounds = array<i64: 1, 1024>}, {pipeline_mode = #tpu.pipeline_mode<synchronous>, transform_indices = @transform_2, window_bounds = array<i64: 1, 1024>}, {transform_indices = @transform_3, window_bounds = array<i64: 16, 1024>}]} {
    %c0 = arith.constant 0 : index
    %c0_0 = arith.constant 0 : index
    %0 = vector.load %arg1[%c0, %c0_0] : memref<16x1024xf32, #tpu.memory_space<vmem>>, vector<16x1024xf32>
    %cst = arith.constant dense<0.000000e+00> : vector<16xf32>
    %1 = vector.multi_reduction <add>, %0, %cst [1] : vector<16x1024xf32> to vector<16xf32>
    %2 = vector.shape_cast %1 : vector<16xf32> to vector<16x1xf32>
    %cst_1 = arith.constant 9.765625E-4 : f32
    %3 = vector.broadcast %cst_1 : f32 to vector<16x1xf32>
    %4 = arith.mulf %2, %3 : vector<16x1xf32>
    %5 = arith.mulf %0, %0 : vector<16x1024xf32>
    %cst_2 = arith.constant dense<0.000000e+00> : vector<16xf32>
    %6 = vector.multi_reduction <add>, %5, %cst_2 [1] : vector<16x1024xf32> to vector<16xf32>
    %7 = vector.shape_cast %6 : vector<16xf32> to vector<16x1xf32>
    %cst_3 = arith.constant 9.765625E-4 : f32
    %8 = vector.broadcast %cst_3 : f32 to vector<16x1xf32>
    %9 = arith.mulf %7, %8 : vector<16x1xf32>
    %10 = arith.mulf %4, %4 : vector<16x1xf32>
    %11 = arith.subf %9, %10 : vector<16x1xf32>
    %cst_4 = arith.constant 0.000000e+00 : f32
    %12 = vector.broadcast %cst_4 : f32 to vector<16x1xf32>
    %13 = arith.maximumf %11, %12 : vector<16x1xf32>
    %cst_5 = arith.constant 9.99999996E-13 : f32
    %14 = vector.broadcast %cst_5 : f32 to vector<16x1xf32>
    %15 = arith.addf %13, %14 : vector<16x1xf32>
    %16 = math.rsqrt %15 : vector<16x1xf32>
    %17 = vector.broadcast %4 : vector<16x1xf32> to vector<16x1024xf32>
    %18 = arith.subf %0, %17 : vector<16x1024xf32>
    %19 = vector.broadcast %16 : vector<16x1xf32> to vector<16x1024xf32>
    %20 = arith.mulf %18, %19 : vector<16x1024xf32>
    %c0_6 = arith.constant 0 : index
    %c0_7 = arith.constant 0 : index
    %21 = vector.load %arg2[%c0_6, %c0_7] : memref<1x1024xf32, #tpu.memory_space<vmem>>, vector<1x1024xf32>
    %22 = vector.broadcast %21 : vector<1x1024xf32> to vector<16x1024xf32>
    %23 = arith.mulf %22, %20 : vector<16x1024xf32>
    %c0_8 = arith.constant 0 : index
    %c0_9 = arith.constant 0 : index
    %24 = vector.load %arg3[%c0_8, %c0_9] : memref<1x1024xf32, #tpu.memory_space<vmem>>, vector<1x1024xf32>
    %25 = vector.broadcast %24 : vector<1x1024xf32> to vector<16x1024xf32>
    %26 = arith.addf %23, %25 : vector<16x1024xf32>
    %c0_10 = arith.constant 0 : index
    %c0_11 = arith.constant 0 : index
    %27 = vector.load %arg4[%c0_10, %c0_11] : memref<16x1024xf32, #tpu.memory_space<vmem>>, vector<16x1024xf32>
    tpu.vector_store %arg4[%c0_10, %c0_11], %26 {strides = array<i32>} : memref<16x1024xf32, #tpu.memory_space<vmem>>, vector<16x1024xf32>,
    return
  }
  func.func @transform_0(%arg0: i32) -> (i32, i32) {
    %c0_i32 = arith.constant 0 : i32
    %c0_i32_0 = arith.constant 0 : i32
    return %arg0, %c0_i32 : i32, i32
  }
  func.func @transform_1(%arg0: i32) -> (i32, i32) {
    %c0_i32 = arith.constant 0 : i32
    %c0_i32_0 = arith.constant 0 : i32
    %c0_i32_1 = arith.constant 0 : i32
    return %c0_i32, %c0_i32_0 : i32, i32
  }
  func.func @transform_2(%arg0: i32) -> (i32, i32) {
    %c0_i32 = arith.constant 0 : i32
    %c0_i32_0 = arith.constant 0 : i32
    %c0_i32_1 = arith.constant 0 : i32
    return %c0_i32, %c0_i32_0 : i32, i32
  }
  func.func @transform_3(%arg0: i32) -> (i32, i32) {
    %c0_i32 = arith.constant 0 : i32
    %c0_i32_0 = arith.constant 0 : i32
    return %arg0, %c0_i32 : i32, i32
  }
}

</mosaic_0001>

<llo_original>
// kernel: tpu_custom_call.1
$region0: #{tpu_custom_call.1}
  #allocation0 [shape = 'u32[]', space=smem, size = 0x4, offset = 0x4, fixed_abs, tag = 'smem constant byte address 0x4 - core index']
  #allocation1 [shape = 'u32[144,128]{1,0:T(1,128)}', space=vmem, size = 0x12000, scoped, tag = 'internal scratch']
  %s0 = inlined_call_operand.hbm [shape: f32[16,1024], index: 0, kind: input, shape index: {}]
  %s1 = inlined_call_operand.hbm [shape: f32[1,1024], index: 1, kind: input, shape index: {}]
  %s2 = inlined_call_operand.hbm [shape: f32[1,1024], index: 2, kind: input, shape index: {}]
  %s3 = inlined_call_operand.hbm [shape: f32[16,1024], index: 3, kind: output, shape index: {}]
  %s4 = sld [smem:[#allocation0]]
  $region34: #{tpu_custom_call.1} parent=0
    _
  %s6 = ssub.s32 1, %s4
  %s7 = scalar_select 0, %s6, %s4
  $region1: #{tpu_custom_call.1} parent=0
    #allocation2 [shape = 'u8[65536]{0}', space=vmem, size = 0x10000, scoped, tag = 'input window, operand 0, single buffered']
    #allocation3 [shape = 's32[1]{0}', space=sflag, size = 0x4, scoped, tag = 'scoped memory for tpu_custom_call.1']
    #allocation4 [shape = 's32[1]{0}', space=sflag, size = 0x4, scoped, tag = 'scoped memory for tpu_custom_call.1']
    #allocation5 [shape = 'u8[4096]{0}', space=vmem, size = 0x1000, scoped, tag = 'input window, operand 1, single buffered']
    #allocation6 [shape = 's32[1]{0}', space=sflag, size = 0x4, scoped, tag = 'scoped memory for tpu_custom_call.1']
    #allocation7 [shape = 'u8[4096]{0}', space=vmem, size = 0x1000, scoped, tag = 'input window, operand 2, single buffered']
    #allocation8 [shape = 'u8[65536]{0}', space=vmem, size = 0x10000, scoped, tag = 'output window, operand 0, single buffered']
    %8 = vsyncpa [#allocation3], 0
    %9 = vsyncpa [#allocation6], 0
    %10 = vsyncpa [#allocation4], 0
    // Predicated region
    $region2: #{tpu_custom_call.1} parent=1 // pred_check
      _
    $region3: #{tpu_custom_call.1} parent=1 // pred_check_branch
      %12 = sbr.rel (0) target = $region5
    $region4: #{tpu_custom_call.1} parent=1 // pred_region
      %s14 = ssub.s32 2048, 2048
      %15 = vsyncadd [#allocation3], %s14
      %s16 = sshll.u32 [#allocation2], 4
      %s17 = int_to_ptr.vmem [resolvable:$true] %s16
      %22 = dma.hbm_to_vmem [thread:$0]  %s0, 2048, %s17, [#allocation3], 1024, 1024, 64
    $region5: #{tpu_custom_call.1} parent=1 // pred_fallthru
      _
    // Predicated region
    $region6: #{tpu_custom_call.1} parent=1 // pred_check
      _
    $region7: #{tpu_custom_call.1} parent=1 // pred_check_branch
      %24 = sbr.rel (0) target = $region9
    $region8: #{tpu_custom_call.1} parent=1 // pred_region
      %s26 = ssub.s32 128, 128
      %27 = vsyncadd [#allocation6], %s26
      %s29 = sshll.u32 [#allocation5], 4
      %s30 = int_to_ptr.vmem [resolvable:$true] %s29
      %32 = dma.hbm_to_vmem [thread:$0]  %s1, 128, %s30, [#allocation6]
    $region9: #{tpu_custom_call.1} parent=1 // pred_fallthru
      _
    // Predicated region
    $region10: #{tpu_custom_call.1} parent=1 // pred_check
      _
    $region11: #{tpu_custom_call.1} parent=1 // pred_check_branch
      %34 = sbr.rel (0) target = $region13
    $region12: #{tpu_custom_call.1} parent=1 // pred_region
      %s36 = ssub.s32 128, 128
      %37 = vsyncadd [#allocation6], %s36
      %s39 = sshll.u32 [#allocation7], 4
      %s40 = int_to_ptr.vmem [resolvable:$true] %s39
      %42 = dma.hbm_to_vmem [thread:$0]  %s2, 128, %s40, [#allocation6]
    $region13: #{tpu_custom_call.1} parent=1 // pred_fallthru
      _
    // Predicated region
    $region14: #{tpu_custom_call.1} parent=1 // pred_check
      _
    $region15: #{tpu_custom_call.1} parent=1 // pred_check_branch
      %44 = sbr.rel (0) target = $region17
    $region16: #{tpu_custom_call.1} parent=1 // pred_region
      %45 = dma.done [#allocation3], 2048
    $region17: #{tpu_custom_call.1} parent=1 // pred_fallthru
      _
    // Predicated region
    $region18: #{tpu_custom_call.1} parent=1 // pred_check
      _
    $region19: #{tpu_custom_call.1} parent=1 // pred_check_branch
      %47 = sbr.rel (0) target = $region21
    $region20: #{tpu_custom_call.1} parent=1 // pred_region
      %48 = dma.done [#allocation6], 128
    $region21: #{tpu_custom_call.1} parent=1 // pred_fallthru
      _
    // Predicated region
    $region22: #{tpu_custom_call.1} parent=1 // pred_check
      _
    $region23: #{tpu_custom_call.1} parent=1 // pred_check_branch
      %50 = sbr.rel (0) target = $region25
    $region24: #{tpu_custom_call.1} parent=1 // pred_region
      %51 = dma.done [#allocation6], 128
    $region25: #{tpu_custom_call.1} parent=1 // pred_fallthru
      _
    %v52 = vld [vmem:[#allocation2] sm:$0xff]
    %v53 = vld [vmem:[#allocation2 + $0x8] sm:$0xff]
    %v54 = vld [vmem:[#allocation2 + $0x10] sm:$0xff]
    %v55 = vld [vmem:[#allocation2 + $0x18] sm:$0xff]
    %v56 = vld [vmem:[#allocation2 + $0x20] sm:$0xff]
    %v57 = vld [vmem:[#allocation2 + $0x28] sm:$0xff]
    %v58 = vld [vmem:[#allocation2 + $0x30] sm:$0xff]
    %v59 = vld [vmem:[#allocation2 + $0x38] sm:$0xff]
    %v60 = vld [vmem:[#allocation2 + $0x40] sm:$0xff]
    %v61 = vld [vmem:[#allocation2 + $0x48] sm:$0xff]
    %v62 = vld [vmem:[#allocation2 + $0x50] sm:$0xff]
    %v63 = vld [vmem:[#allocation2 + $0x58] sm:$0xff]
    %v64 = vld [vmem:[#allocation2 + $0x60] sm:$0xff]
    %v65 = vld [vmem:[#allocation2 + $0x68] sm:$0xff]
    %v66 = vld [vmem:[#allocation2 + $0x70] sm:$0xff]
    %v67 = vld [vmem:[#allocation2 + $0x78] sm:$0xff]
    %v68 = vadd.f32 %v52, %v53
    %v69 = vadd.f32 %v68, %v54
    %v70 = vadd.f32 %v69, %v55
    %v71 = vadd.f32 %v70, %v56
    %v72 = vadd.f32 %v71, %v57
    %v73 = vadd.f32 %v72, %v58
    %v74 = vadd.f32 %v73, %v59
    %75 = vadd.xlane.f32.xlu0 %v74
    %v76 = vpop.xlane.xlu0 %75
    %v77 = vadd.f32 %v60, %v61
    %v78 = vadd.f32 %v77, %v62
    %v79 = vadd.f32 %v78, %v63
    %v80 = vadd.f32 %v79, %v64
    %v81 = vadd.f32 %v80, %v65
    %v82 = vadd.f32 %v81, %v66
    %v83 = vadd.f32 %v82, %v67
    %84 = vadd.xlane.f32.xlu0 %v83
    %v85 = vpop.xlane.xlu0 %84
    %v86 = vmul.f32 %v76, 0.0009765625
    %v87 = vmul.f32 %v85, 0.0009765625
    %v88 = vmul.f32 %v52, %v52
    %v89 = vmul.f32 %v53, %v53
    %v90 = vmul.f32 %v54, %v54
    %v91 = vmul.f32 %v55, %v55
    %v92 = vmul.f32 %v56, %v56
    %v93 = vmul.f32 %v57, %v57
    %v94 = vmul.f32 %v58, %v58
    %v95 = vmul.f32 %v59, %v59
    %v96 = vmul.f32 %v60, %v60
    %v97 = vmul.f32 %v61, %v61
    %v98 = vmul.f32 %v62, %v62
    %v99 = vmul.f32 %v63, %v63
    %v100 = vmul.f32 %v64, %v64
    %v101 = vmul.f32 %v65, %v65
    %v102 = vmul.f32 %v66, %v66
    %v103 = vmul.f32 %v67, %v67
    %v104 = vadd.f32 %v88, %v89
    %v105 = vadd.f32 %v104, %v90
    %v106 = vadd.f32 %v105, %v91
    %v107 = vadd.f32 %v106, %v92
    %v108 = vadd.f32 %v107, %v93
    %v109 = vadd.f32 %v108, %v94
    %v110 = vadd.f32 %v109, %v95
    %111 = vadd.xlane.f32.xlu0 %v110
    %v112 = vpop.xlane.xlu0 %111
    %v113 = vadd.f32 %v96, %v97
    %v114 = vadd.f32 %v113, %v98
    %v115 = vadd.f32 %v114, %v99
    %v116 = vadd.f32 %v115, %v100
    %v117 = vadd.f32 %v116, %v101
    %v118 = vadd.f32 %v117, %v102
    %v119 = vadd.f32 %v118, %v103
    %120 = vadd.xlane.f32.xlu0 %v119
    %v121 = vpop.xlane.xlu0 %120
    %v122 = vmul.f32 %v112, 0.0009765625
    %v123 = vmul.f32 %v121, 0.0009765625
    %v124 = vmul.f32 %v86, %v86
    %v125 = vmul.f32 %v87, %v87
    %v126 = vsub.f32 %v122, %v124
    %v127 = vsub.f32 %v123, %v125
    %v128 = vmax.f32 %v126, 0.0
    %v129 = vmax.f32 %v127, 0.0
    %v130 = vadd.f32 %v128, 1e-12
    %v131 = vadd.f32 %v129, 1e-12
    %v132 = vrsqrt.pop %v130
    %v133 = vrsqrt.pop %v131
    %v134 = vsub.f32 %v52, %v86
    %v135 = vsub.f32 %v53, %v86
    %v136 = vsub.f32 %v54, %v86
    %v137 = vsub.f32 %v55, %v86
    %v138 = vsub.f32 %v56, %v86
    %v139 = vsub.f32 %v57, %v86
    %v140 = vsub.f32 %v58, %v86
    %v141 = vsub.f32 %v59, %v86
    %v142 = vsub.f32 %v60, %v87
    %v143 = vsub.f32 %v61, %v87
    %v144 = vsub.f32 %v62, %v87
    %v145 = vsub.f32 %v63, %v87
    %v146 = vsub.f32 %v64, %v87
    %v147 = vsub.f32 %v65, %v87
    %v148 = vsub.f32 %v66, %v87
    %v149 = vsub.f32 %v67, %v87
    %v150 = vmul.f32 %v134, %v132
    %v151 = vmul.f32 %v135, %v132
    %v152 = vmul.f32 %v136, %v132
    %v153 = vmul.f32 %v137, %v132
    %v154 = vmul.f32 %v138, %v132
    %v155 = vmul.f32 %v139, %v132
    %v156 = vmul.f32 %v140, %v132
    %v157 = vmul.f32 %v141, %v132
    %v158 = vmul.f32 %v142, %v133
    %v159 = vmul.f32 %v143, %v133
    %v160 = vmul.f32 %v144, %v133
    %v161 = vmul.f32 %v145, %v133
    %v162 = vmul.f32 %v146, %v133
    %v163 = vmul.f32 %v147, %v133
    %v164 = vmul.f32 %v148, %v133
    %v165 = vmul.f32 %v149, %v133
    %v166 = vld [vmem:[#allocation5] sm:$0xff]
    %v168 = vlaneseq
    %v169 = vshrl.u32 %v168, 7
    %v170 = vsub.s32 0, %v169
    %v171 = vrot.slane %v166, %v170
    %v172 = vlaneseq
    %v173 = vshrl.u32 %v172, 7
    %v174 = vsub.s32 1, %v173
    %v175 = vrot.slane %v166, %v174
    %v176 = vlaneseq
    %v177 = vshrl.u32 %v176, 7
    %v178 = vsub.s32 2, %v177
    %v179 = vrot.slane %v166, %v178
    %v180 = vlaneseq
    %v181 = vshrl.u32 %v180, 7
    %v182 = vsub.s32 3, %v181
    %v183 = vrot.slane %v166, %v182
    %v184 = vlaneseq
    %v185 = vshrl.u32 %v184, 7
    %v186 = vsub.s32 4, %v185
    %v187 = vrot.slane %v166, %v186
    %v188 = vlaneseq
    %v189 = vshrl.u32 %v188, 7
    %v190 = vsub.s32 5, %v189
    %v191 = vrot.slane %v166, %v190
    %v192 = vlaneseq
    %v193 = vshrl.u32 %v192, 7
    %v194 = vsub.s32 6, %v193
    %v195 = vrot.slane %v166, %v194
    %v196 = vlaneseq
    %v197 = vshrl.u32 %v196, 7
    %v198 = vsub.s32 7, %v197
    %v199 = vrot.slane %v166, %v198
    %v208 = vmul.f32 %v171, %v150
    %v209 = vmul.f32 %v175, %v151
    %v210 = vmul.f32 %v179, %v152
    %v211 = vmul.f32 %v183, %v153
    %v212 = vmul.f32 %v187, %v154
    %v213 = vmul.f32 %v191, %v155
    %v214 = vmul.f32 %v195, %v156
    %v215 = vmul.f32 %v199, %v157
    %v216 = vmul.f32 %v171, %v158
    %v217 = vmul.f32 %v175, %v159
    %v218 = vmul.f32 %v179, %v160
    %v219 = vmul.f32 %v183, %v161
    %v220 = vmul.f32 %v187, %v162
    %v221 = vmul.f32 %v191, %v163
    %v222 = vmul.f32 %v195, %v164
    %v223 = vmul.f32 %v199, %v165
    %v224 = vld [vmem:[#allocation7] sm:$0xff]
    %v226 = vlaneseq
    %v227 = vshrl.u32 %v226, 7
    %v228 = vsub.s32 0, %v227
    %v229 = vrot.slane %v224, %v228
    %v230 = vlaneseq
    %v231 = vshrl.u32 %v230, 7
    %v232 = vsub.s32 1, %v231
    %v233 = vrot.slane %v224, %v232
    %v234 = vlaneseq
    %v235 = vshrl.u32 %v234, 7
    %v236 = vsub.s32 2, %v235
    %v237 = vrot.slane %v224, %v236
    %v238 = vlaneseq
    %v239 = vshrl.u32 %v238, 7
    %v240 = vsub.s32 3, %v239
    %v241 = vrot.slane %v224, %v240
    %v242 = vlaneseq
    %v243 = vshrl.u32 %v242, 7
    %v244 = vsub.s32 4, %v243
    %v245 = vrot.slane %v224, %v244
    %v246 = vlaneseq
    %v247 = vshrl.u32 %v246, 7
    %v248 = vsub.s32 5, %v247
    %v249 = vrot.slane %v224, %v248
    %v250 = vlaneseq
    %v251 = vshrl.u32 %v250, 7
    %v252 = vsub.s32 6, %v251
    %v253 = vrot.slane %v224, %v252
    %v254 = vlaneseq
    %v255 = vshrl.u32 %v254, 7
    %v256 = vsub.s32 7, %v255
    %v257 = vrot.slane %v224, %v256
    %v266 = vadd.f32 %v208, %v229
    %v267 = vadd.f32 %v209, %v233
    %v268 = vadd.f32 %v210, %v237
    %v269 = vadd.f32 %v211, %v241
    %v270 = vadd.f32 %v212, %v245
    %v271 = vadd.f32 %v213, %v249
    %v272 = vadd.f32 %v214, %v253
    %v273 = vadd.f32 %v215, %v257
    %v274 = vadd.f32 %v216, %v229
    %v275 = vadd.f32 %v217, %v233
    %v276 = vadd.f32 %v218, %v237
    %v277 = vadd.f32 %v219, %v241
    %v278 = vadd.f32 %v220, %v245
    %v279 = vadd.f32 %v221, %v249
    %v280 = vadd.f32 %v222, %v253
    %v281 = vadd.f32 %v223, %v257
    %282 = vst [vmem:[#allocation8] sm:$0xff] %v266
    %283 = vst [vmem:[#allocation8 + $0x8] sm:$0xff] %v267
    %284 = vst [vmem:[#allocation8 + $0x10] sm:$0xff] %v268
    %285 = vst [vmem:[#allocation8 + $0x18] sm:$0xff] %v269
    %286 = vst [vmem:[#allocation8 + $0x20] sm:$0xff] %v270
    %287 = vst [vmem:[#allocation8 + $0x28] sm:$0xff] %v271
    %288 = vst [vmem:[#allocation8 + $0x30] sm:$0xff] %v272
    %289 = vst [vmem:[#allocation8 + $0x38] sm:$0xff] %v273
    %290 = vst [vmem:[#allocation8 + $0x40] sm:$0xff] %v274
    %291 = vst [vmem:[#allocation8 + $0x48] sm:$0xff] %v275
    %292 = vst [vmem:[#allocation8 + $0x50] sm:$0xff] %v276
    %293 = vst [vmem:[#allocation8 + $0x58] sm:$0xff] %v277
    %294 = vst [vmem:[#allocation8 + $0x60] sm:$0xff] %v278
    %295 = vst [vmem:[#allocation8 + $0x68] sm:$0xff] %v279
    %296 = vst [vmem:[#allocation8 + $0x70] sm:$0xff] %v280
    %297 = vst [vmem:[#allocation8 + $0x78] sm:$0xff] %v281
    // Predicated region
    $region26: #{tpu_custom_call.1} parent=1 // pred_check
      _
    $region27: #{tpu_custom_call.1} parent=1 // pred_check_branch
      %299 = sbr.rel (0) target = $region29
    $region28: #{tpu_custom_call.1} parent=1 // pred_region
      %s301 = ssub.s32 2048, 2048
      %302 = vsyncadd [#allocation4], %s301
      %s303 = sshll.u32 [#allocation8], 4
      %s304 = int_to_ptr.vmem [resolvable:$true] %s303
      %309 = dma.vmem_to_hbm [thread:$0]  %s304, 2048, %s3, [#allocation4], 1024, 1024, 64
    $region29: #{tpu_custom_call.1} parent=1 // pred_fallthru
      _
    // Predicated region
    $region30: #{tpu_custom_call.1} parent=1 // pred_check
      _
    $region31: #{tpu_custom_call.1} parent=1 // pred_check_branch
      %311 = sbr.rel (0) target = $region33
    $region32: #{tpu_custom_call.1} parent=1 // pred_region
      %312 = dma.done [#allocation4], 2048
    $region33: #{tpu_custom_call.1} parent=1 // pred_fallthru
      _
    %313 = vsyncpa [#allocation3], 1
    %314 = vsyncpa [#allocation6], 1
    %315 = vsyncpa [#allocation4], 1

</llo_original>
